<compile_context>
chip_gen: v5e
topology: v5e:2x2
jax: 0.10.0
libtpu: 0.0.40
codegen_flags: <defaults>
</compile_context>

<pallas_src>
import functools
import math

import jax
import jax.numpy as jnp
from jax.experimental import pallas as pl
from jax.experimental.pallas import tpu as pltpu


def _pick_hw_tile(hw, cin, cout, budget_bytes=8 * 1024 * 1024):
    # Largest lane-aligned divisor of H*W whose double-buffered f32 tiles
    # (x input + y output) fit a conservative VMEM budget; otherwise the full
    # extent (a block equal to the array dim is always legal).
    max_thw = max(128, budget_bytes // (8 * (cin + cout)))  # 2 bufs * 4 B * (cin+cout)
    for cand in (8192, 4096, 2048, 1024, 512, 256, 128):
        if cand <= max_thw and hw % cand == 0:
            return cand
    return hw


def _stats_kernel(x_ref, w_ref, gamma_ref, beta_ref,
                  scale_ref, shift_ref,
                  sum_acc, sq_acc,
                  *, inv_m, eps):
    # x_ref: (1, Cin, THW)   w_ref: (Cout, Cin)
    # gamma/beta: (Cout, 1)  scale/shift outputs: (Cout, 1)
    # sum_acc / sq_acc: persistent VMEM scratch (Cout, 1), f32
    b = pl.program_id(0)
    t = pl.program_id(1)
    is_first = jnp.logical_and(b == 0, t == 0)
    is_last = jnp.logical_and(b == pl.num_programs(0) - 1,
                              t == pl.num_programs(1) - 1)

    @pl.when(is_first)
    def _():
        sum_acc[...] = jnp.zeros_like(sum_acc)
        sq_acc[...] = jnp.zeros_like(sq_acc)

    x = x_ref[0]                                                    # (Cin, THW)
    # 1x1 conv == matmul over channels (MXU); lane-dense (Cout, THW) result.
    y = jnp.dot(w_ref[...], x, preferred_element_type=jnp.float32)  # (Cout, THW)

    # Per-channel partial sums (cross-lane reduce on the XLU), f32 accumulation.
    sum_acc[...] += jnp.sum(y, axis=1, keepdims=True)
    sq_acc[...] += jnp.sum(y * y, axis=1, keepdims=True)

    @pl.when(is_last)
    def _():
        # Biased batch statistics (training-mode BN normalization).
        mean = sum_acc[...] * inv_m
        var = jnp.maximum(sq_acc[...] * inv_m - mean * mean, 0.0)
        inv_std = jax.lax.rsqrt(var + eps)
        scale = gamma_ref[...] * inv_std
        scale_ref[...] = scale
        shift_ref[...] = beta_ref[...] - mean * scale


def _apply_kernel(x_ref, w_ref, scale_ref, shift_ref, o_ref):
    # x_ref: (1, Cin, THW)  w_ref: (Cout, Cin)  scale/shift: (Cout, 1)
    # o_ref: (1, Cout, THW)
    x = x_ref[0]                                                    # (Cin, THW)
    # Fold BN scale into the 1x1 weight (Cout*Cin muls, absorbed by the MXU op)
    # instead of a per-element multiply over the whole (Cout, THW) tile.
    w_folded = w_ref[...] * scale_ref[...]                          # (Cout, Cin)
    y = jnp.dot(w_folded, x, preferred_element_type=jnp.float32)    # (Cout, THW)
    o_ref[0] = jnp.maximum(y + shift_ref[...], 0.0).astype(o_ref.dtype)


def conv_bn_relu(x_nchw, weight, gamma, beta, eps=1e-5):
    """x_nchw: (N, Cin, H, W); weight: (Cout, Cin, 1, 1); gamma/beta: (Cout,)."""
    n, cin, h, w = x_nchw.shape
    cout, cin_w, kh, kw = weight.shape
    assert (kh, kw) == (1, 1) and cin_w == cin, "only 1x1 / stride 1 / pad 0"

    hw = h * w
    thw = _pick_hw_tile(hw, cin, cout)
    num_t = hw // thw

    # Free reshapes only: NCHW -> (N, Cin, H*W); spatial stays the last dim.
    x3 = x_nchw.reshape(n, cin, hw)
    w_mat = weight[:, :, 0, 0]                       # (Cout, Cin)
    gamma2 = gamma.reshape(cout, 1).astype(jnp.float32)
    beta2 = beta.reshape(cout, 1).astype(jnp.float32)
    inv_m = 1.0 / float(n * hw)

    # ---- Pass 1: batch statistics -> folded per-channel scale/shift ----
    scale, shift = pl.pallas_call(
        functools.partial(_stats_kernel, inv_m=inv_m, eps=float(eps)),
        out_shape=(jax.ShapeDtypeStruct((cout, 1), jnp.float32),
                   jax.ShapeDtypeStruct((cout, 1), jnp.float32)),
        grid_spec=pltpu.PrefetchScalarGridSpec(
            num_scalar_prefetch=0,
            grid=(n, num_t),
            in_specs=[
                pl.BlockSpec((1, cin, thw), lambda b, t: (b, 0, t)),
                pl.BlockSpec((cout, cin), lambda b, t: (0, 0)),
                pl.BlockSpec((cout, 1), lambda b, t: (0, 0)),
                pl.BlockSpec((cout, 1), lambda b, t: (0, 0)),
            ],
            out_specs=(pl.BlockSpec((cout, 1), lambda b, t: (0, 0)),
                       pl.BlockSpec((cout, 1), lambda b, t: (0, 0))),
            scratch_shapes=[pltpu.VMEM((cout, 1), jnp.float32),
                            pltpu.VMEM((cout, 1), jnp.float32)],
        ),
        # Accumulator output is resident across both axes -> keep sequential.
        compiler_params=pltpu.CompilerParams(
            dimension_semantics=("arbitrary", "arbitrary")),
    )(x3, w_mat, gamma2, beta2)

    # ---- Pass 2: conv (recompute) + folded BN affine + ReLU ----
    out3 = pl.pallas_call(
        _apply_kernel,
        out_shape=jax.ShapeDtypeStruct((n, cout, hw), x_nchw.dtype),
        grid_spec=pltpu.PrefetchScalarGridSpec(
            num_scalar_prefetch=0,
            grid=(n, num_t),
            in_specs=[
                pl.BlockSpec((1, cin, thw), lambda b, t: (b, 0, t)),
                pl.BlockSpec((cout, cin), lambda b, t: (0, 0)),
                pl.BlockSpec((cout, 1), lambda b, t: (0, 0)),
                pl.BlockSpec((cout, 1), lambda b, t: (0, 0)),
            ],
            out_specs=pl.BlockSpec((1, cout, thw), lambda b, t: (b, 0, t)),
        ),
        # Fully independent tiles -> shard across TensorCores on v7x.
        compiler_params=pltpu.CompilerParams(
            dimension_semantics=("parallel", "parallel")),
    )(x3, w_mat, scale, shift)

    # Free reshape back to NCHW.
    return out3.reshape(n, cout, h, w)


def init_params(key, in_planes, out_planes, kernel_size=1):
    # Conv2d weight ~ N(0, sqrt(2 / (k*k*out_planes))), no bias.
    fan = kernel_size * kernel_size * out_planes
    std = math.sqrt(2.0 / fan)
    weight = std * jax.random.normal(
        key, (out_planes, in_planes, kernel_size, kernel_size), dtype=jnp.float32
    )
    # BatchNorm2d: weight (gamma) = 1, bias (beta) = 0.
    gamma = jnp.ones((out_planes,), dtype=jnp.float32)
    beta = jnp.zeros((out_planes,), dtype=jnp.float32)
    return weight, gamma, beta


def reference(x_nchw, weight, gamma, beta):
    # Pure-JAX reference: 1x1 conv + training-mode BN + ReLU.
    y = jnp.einsum("nchw,oc->nohw", x_nchw, weight[:, :, 0, 0])
    mean = jnp.mean(y, axis=(0, 2, 3), keepdims=True)
    var = jnp.mean((y - mean) ** 2, axis=(0, 2, 3), keepdims=True)
    yhat = (y - mean) * jax.lax.rsqrt(var + 1e-5)
    z = yhat * gamma.reshape(1, -1, 1, 1) + beta.reshape(1, -1, 1, 1)
    return jnp.maximum(z, 0.0)


if __name__ == "__main__":
    key = jax.random.PRNGKey(0)
    k_x, k_w = jax.random.split(key)

    in_planes, out_planes = 4, 8
    x = jax.random.normal(k_x, (2, in_planes, 16, 16), dtype=jnp.float32)
    weight, gamma, beta = init_params(k_w, in_planes, out_planes, kernel_size=1)

    out = conv_bn_relu(x, weight, gamma, beta)
    out = jax.block_until_ready(out)

    ref = reference(x, weight, gamma, beta)
    assert out.shape == (2, out_planes, 16, 16)
    assert jnp.allclose(out, ref, atol=1e-4, rtol=1e-4)

    print("KERNEL_OK")
</pallas_src>

<mosaic_0001>
module attributes {stable_mosaic.version = 11 : i64} {
  func.func @_stats_kernel(%arg0: i32, %arg1: i32, %arg2: memref<1x4x256xf32, #tpu.memory_space<vmem>>, %arg3: memref<8x4xf32, #tpu.memory_space<vmem>>, %arg4: memref<8x1xf32, #tpu.memory_space<vmem>>, %arg5: memref<8x1xf32, #tpu.memory_space<vmem>>, %arg6: memref<8x1xf32, #tpu.memory_space<vmem>>, %arg7: memref<8x1xf32, #tpu.memory_space<vmem>>, %arg8: memref<8x1xf32, #tpu.memory_space<vmem>>, %arg9: memref<8x1xf32, #tpu.memory_space<vmem>>) attributes {dimension_semantics = [#tpu.dimension_semantics<arbitrary>, #tpu.dimension_semantics<arbitrary>], iteration_bounds = array<i64: 2, 1>, scalar_prefetch = 0 : i64, scratch_operands = 2 : i64, tpu.core_type = #tpu.core_type<tc>, window_params = [{transform_indices = @transform_0, window_bounds = array<i64: 1, 4, 256>}, {pipeline_mode = #tpu.pipeline_mode<synchronous>, transform_indices = @transform_1, window_bounds = array<i64: 8, 4>}, {pipeline_mode = #tpu.pipeline_mode<synchronous>, transform_indices = @transform_2, window_bounds = array<i64: 8, 1>}, {pipeline_mode = #tpu.pipeline_mode<synchronous>, transform_indices = @transform_3, window_bounds = array<i64: 8, 1>}, {pipeline_mode = #tpu.pipeline_mode<synchronous>, transform_indices = @transform_4, window_bounds = array<i64: 8, 1>}, {pipeline_mode = #tpu.pipeline_mode<synchronous>, transform_indices = @transform_5, window_bounds = array<i64: 8, 1>}]} {
    %c0_i32 = arith.constant 0 : i32
    %0 = arith.cmpi eq, %arg0, %c0_i32 : i32
    %c0_i32_0 = arith.constant 0 : i32
    %1 = arith.cmpi eq, %arg1, %c0_i32_0 : i32
    %2 = arith.andi %0, %1 : i1
    %c1_i32 = arith.constant 1 : i32
    %3 = arith.cmpi eq, %arg0, %c1_i32 : i32
    %c0_i32_1 = arith.constant 0 : i32
    %4 = arith.cmpi eq, %arg1, %c0_i32_1 : i32
    %5 = arith.andi %3, %4 : i1
    %6 = arith.extui %2 : i1 to i32
    %c0_i32_2 = arith.constant 0 : i32
    %7 = arith.cmpi ne, %6, %c0_i32_2 : i32
    scf.if %7 {
      %cst_18 = arith.constant 0.000000e+00 : f32
      %25 = vector.broadcast %cst_18 : f32 to vector<8x1xf32>
      %c0_19 = arith.constant 0 : index
      %c0_20 = arith.constant 0 : index
      %26 = vector.load %arg8[%c0_19, %c0_20] : memref<8x1xf32, #tpu.memory_space<vmem>>, vector<8x1xf32>
      tpu.vector_store %arg8[%c0_19, %c0_20], %25 {strides = array<i32>} : memref<8x1xf32, #tpu.memory_space<vmem>>, vector<8x1xf32>,
      %cst_21 = arith.constant 0.000000e+00 : f32
      %27 = vector.broadcast %cst_21 : f32 to vector<8x1xf32>
      %c0_22 = arith.constant 0 : index
      %c0_23 = arith.constant 0 : index
      %28 = vector.load %arg9[%c0_22, %c0_23] : memref<8x1xf32, #tpu.memory_space<vmem>>, vector<8x1xf32>
      tpu.vector_store %arg9[%c0_22, %c0_23], %27 {strides = array<i32>} : memref<8x1xf32, #tpu.memory_space<vmem>>, vector<8x1xf32>,
    } else {
    }
    %c0 = arith.constant 0 : index
    %c0_3 = arith.constant 0 : index
    %c0_4 = arith.constant 0 : index
    %8 = vector.load %arg2[%c0, %c0_3, %c0_4] : memref<1x4x256xf32, #tpu.memory_space<vmem>>, vector<1x4x256xf32>
    %9 = vector.shape_cast %8 : vector<1x4x256xf32> to vector<4x256xf32>
    %c0_5 = arith.constant 0 : index
    %c0_6 = arith.constant 0 : index
    %10 = vector.load %arg3[%c0_5, %c0_6] : memref<8x4xf32, #tpu.memory_space<vmem>>, vector<8x4xf32>
    %cst = arith.constant dense<0.000000e+00> : vector<8x256xf32>
    %11 = tpu.matmul %10, %9, %cst {dimension_numbers = #tpu.dot_dimension_numbers<[1], [0], [0], [1], [0, 0, 1, 1], [], []>} : vector<8x4xf32>, vector<4x256xf32>, vector<8x256xf32> -> vector<8x256xf32>
    %c0_7 = arith.constant 0 : index
    %c0_8 = arith.constant 0 : index
    %12 = vector.load %arg8[%c0_7, %c0_8] : memref<8x1xf32, #tpu.memory_space<vmem>>, vector<8x1xf32>
    %cst_9 = arith.constant dense<0.000000e+00> : vector<8xf32>
    %13 = vector.multi_reduction <add>, %11, %cst_9 [1] : vector<8x256xf32> to vector<8xf32>
    %14 = vector.shape_cast %13 : vector<8xf32> to vector<8x1xf32>
    %15 = arith.addf %12, %14 : vector<8x1xf32>
    %c0_10 = arith.constant 0 : index
    %c0_11 = arith.constant 0 : index
    %16 = vector.load %arg8[%c0_10, %c0_11] : memref<8x1xf32, #tpu.memory_space<vmem>>, vector<8x1xf32>
    tpu.vector_store %arg8[%c0_10, %c0_11], %15 {strides = array<i32>} : memref<8x1xf32, #tpu.memory_space<vmem>>, vector<8x1xf32>,
    %c0_12 = arith.constant 0 : index
    %c0_13 = arith.constant 0 : index
    %17 = vector.load %arg9[%c0_12, %c0_13] : memref<8x1xf32, #tpu.memory_space<vmem>>, vector<8x1xf32>
    %18 = arith.mulf %11, %11 : vector<8x256xf32>
    %cst_14 = arith.constant dense<0.000000e+00> : vector<8xf32>
    %19 = vector.multi_reduction <add>, %18, %cst_14 [1] : vector<8x256xf32> to vector<8xf32>
    %20 = vector.shape_cast %19 : vector<8xf32> to vector<8x1xf32>
    %21 = arith.addf %17, %20 : vector<8x1xf32>
    %c0_15 = arith.constant 0 : index
    %c0_16 = arith.constant 0 : index
    %22 = vector.load %arg9[%c0_15, %c0_16] : memref<8x1xf32, #tpu.memory_space<vmem>>, vector<8x1xf32>
    tpu.vector_store %arg9[%c0_15, %c0_16], %21 {strides = array<i32>} : memref<8x1xf32, #tpu.memory_space<vmem>>, vector<8x1xf32>,
    %23 = arith.extui %5 : i1 to i32
    %c0_i32_17 = arith.constant 0 : i32
    %24 = arith.cmpi ne, %23, %c0_i32_17 : i32
    scf.if %24 {
      %c0_18 = arith.constant 0 : index
      %c0_19 = arith.constant 0 : index
      %25 = vector.load %arg8[%c0_18, %c0_19] : memref<8x1xf32, #tpu.memory_space<vmem>>, vector<8x1xf32>
      %cst_20 = arith.constant 0.001953125 : f32
      %26 = vector.broadcast %cst_20 : f32 to vector<8x1xf32>
      %27 = arith.mulf %25, %26 : vector<8x1xf32>
      %c0_21 = arith.constant 0 : index
      %c0_22 = arith.constant 0 : index
      %28 = vector.load %arg9[%c0_21, %c0_22] : memref<8x1xf32, #tpu.memory_space<vmem>>, vector<8x1xf32>
      %cst_23 = arith.constant 0.001953125 : f32
      %29 = vector.broadcast %cst_23 : f32 to vector<8x1xf32>
      %30 = arith.mulf %28, %29 : vector<8x1xf32>
      %31 = arith.mulf %27, %27 : vector<8x1xf32>
      %32 = arith.subf %30, %31 : vector<8x1xf32>
      %cst_24 = arith.constant 0.000000e+00 : f32
      %33 = vector.broadcast %cst_24 : f32 to vector<8x1xf32>
      %34 = arith.maximumf %32, %33 : vector<8x1xf32>
      %cst_25 = arith.constant 9.99999974E-6 : f32
      %35 = vector.broadcast %cst_25 : f32 to vector<8x1xf32>
      %36 = arith.addf %34, %35 : vector<8x1xf32>
      %37 = math.rsqrt %36 : vector<8x1xf32>
      %c0_26 = arith.constant 0 : index
      %c0_27 = arith.constant 0 : index
      %38 = vector.load %arg4[%c0_26, %c0_27] : memref<8x1xf32, #tpu.memory_space<vmem>>, vector<8x1xf32>
      %39 = arith.mulf %38, %37 : vector<8x1xf32>
      %c0_28 = arith.constant 0 : index
      %c0_29 = arith.constant 0 : index
      %40 = vector.load %arg6[%c0_28, %c0_29] : memref<8x1xf32, #tpu.memory_space<vmem>>, vector<8x1xf32>
      tpu.vector_store %arg6[%c0_28, %c0_29], %39 {strides = array<i32>} : memref<8x1xf32, #tpu.memory_space<vmem>>, vector<8x1xf32>,
      %c0_30 = arith.constant 0 : index
      %c0_31 = arith.constant 0 : index
      %41 = vector.load %arg5[%c0_30, %c0_31] : memref<8x1xf32, #tpu.memory_space<vmem>>, vector<8x1xf32>
      %42 = arith.mulf %27, %39 : vector<8x1xf32>
      %43 = arith.subf %41, %42 : vector<8x1xf32>
      %c0_32 = arith.constant 0 : index
      %c0_33 = arith.constant 0 : index
      %44 = vector.load %arg7[%c0_32, %c0_33] : memref<8x1xf32, #tpu.memory_space<vmem>>, vector<8x1xf32>
      tpu.vector_store %arg7[%c0_32, %c0_33], %43 {strides = array<i32>} : memref<8x1xf32, #tpu.memory_space<vmem>>, vector<8x1xf32>,
    } else {
    }
    return
  }
  func.func @transform_0(%arg0: i32, %arg1: i32) -> (i32, i32, i32) {
    %c0_i32 = arith.constant 0 : i32
    %c0_i32_0 = arith.constant 0 : i32
    return %arg0, %c0_i32, %arg1 : i32, i32, i32
  }
  func.func @transform_1(%arg0: i32, %arg1: i32) -> (i32, i32) {
    %c0_i32 = arith.constant 0 : i32
    %c0_i32_0 = arith.constant 0 : i32
    %c0_i32_1 = arith.constant 0 : i32
    return %c0_i32, %c0_i32_0 : i32, i32
  }
  func.func @transform_2(%arg0: i32, %arg1: i32) -> (i32, i32) {
    %c0_i32 = arith.constant 0 : i32
    %c0_i32_0 = arith.constant 0 : i32
    %c0_i32_1 = arith.constant 0 : i32
    return %c0_i32, %c0_i32_0 : i32, i32
  }
  func.func @transform_3(%arg0: i32, %arg1: i32) -> (i32, i32) {
    %c0_i32 = arith.constant 0 : i32
    %c0_i32_0 = arith.constant 0 : i32
    %c0_i32_1 = arith.constant 0 : i32
    return %c0_i32, %c0_i32_0 : i32, i32
  }
  func.func @transform_4(%arg0: i32, %arg1: i32) -> (i32, i32) {
    %c0_i32 = arith.constant 0 : i32
    %c0_i32_0 = arith.constant 0 : i32
    %c0_i32_1 = arith.constant 0 : i32
    return %c0_i32, %c0_i32_0 : i32, i32
  }
  func.func @transform_5(%arg0: i32, %arg1: i32) -> (i32, i32) {
    %c0_i32 = arith.constant 0 : i32
    %c0_i32_0 = arith.constant 0 : i32
    %c0_i32_1 = arith.constant 0 : i32
    return %c0_i32, %c0_i32_0 : i32, i32
  }
}

</mosaic_0001>

<llo_original>
// kernel: tpu_custom_call.1
$region0: #{tpu_custom_call.1}
  #allocation0 [shape = 'u32[]', space=smem, size = 0x4, offset = 0x4, fixed_abs, tag = 'smem constant byte address 0x4 - core index']
  #allocation1 [shape = 'u32[72,128]{1,0:T(1,128)}', space=vmem, size = 0x9000, scoped, tag = 'internal scratch']
  #allocation2 [shape = 'f32[8,1]{1,0:T(8,128)}', space=vmem, size = 0x1000, scoped, tag = 'scratch operand']
  #allocation3 [shape = 'f32[8,1]{1,0:T(8,128)}', space=vmem, size = 0x1000, scoped, tag = 'scratch operand']
  %s0 = inlined_call_operand.vmem [shape: f32[2,4,256], index: 0, kind: input, shape index: {}]
  %s1 = inlined_call_operand.vmem [shape: f32[8,4], index: 1, kind: input, shape index: {}]
  %s2 = inlined_call_operand.vmem [shape: f32[8,1], index: 2, kind: input, shape index: {}]
  %s3 = inlined_call_operand.vmem [shape: f32[8,1], index: 3, kind: input, shape index: {}]
  %s4 = inlined_call_operand.vmem [shape: f32[8,1], index: 4, kind: output, shape index: {0}]
  %s5 = inlined_call_operand.vmem [shape: f32[8,1], index: 5, kind: output, shape index: {1}]
  %6 = xla_tuple %s4, %s5
  %s7 = sld [smem:[#allocation0]]
  $region65: #{tpu_custom_call.1} parent=0
    _
  %s9 = ssub.s32 1, %s7
  %s10 = scalar_select 0, %s9, %s7
  loop: start=0, step=1, limit=4
  $region2: #{tpu_custom_call.1} parent=0 // loop_pre_header
    _
  $region3: #{tpu_custom_call.1} parent=0 // loop_header
    %s12 = sphi 0, %s16
    %p13 = scmp.ge.s32.totalorder %s12, 4
    %s19 = sphi 0, %s31
    %s20 = sphi 0, %s27
    %s21 = sphi 0, %s19
    %s22 = sphi 0, %s20
    %s23 = sphi 0, %s21
    %s24 = sphi 0, %s22
    %s36 = sphi 0, %s38
    %s39 = sphi 0, %s36
    %s40 = sphi 0, %s39
    %s56 = sphi 0, %s40
    %s60 = sphi 0, %s60
    %s62 = sphi 0, %s60
    %s63 = sphi 0, %s62
    %s77 = sphi 0, %s63
    %s81 = sphi 0, %s81
    %s83 = sphi 0, %s81
    %s84 = sphi 0, %s83
    %s98 = sphi 0, %s84
    %s102 = sphi 0, %s102
    %s104 = sphi 0, %s102
    %s105 = sphi 0, %s104
    %s119 = sphi 0, %s105
    %s123 = sphi 0, %s123
    %s125 = sphi 0, %s123
    %s126 = sphi 0, %s125
    %s140 = sphi 0, %s126
    %s144 = sphi 0, %s144
    %s146 = sphi 0, %s144
    %s147 = sphi 0, %s146
    %s161 = sphi 0, %s147
  $region4: #{tpu_custom_call.1} parent=0 // loop_header_branch
    %15 = sbr.rel (%p13) target = $region8
  $region5: #{tpu_custom_call.1} parent=0 // loop_body
    %s17 = ssub.s32 %s12, 1
    %s18 = ssub.s32 %s12, 2
    %s25 = sadd.s32 1, %s20
    %p26 = scmp.ge.s32.totalorder %s25, 1
    %s27 = scalar_select %p26, 0, %s25
    %s28 = sadd.s32 1, %s19
    %s29 = scalar_select %p26, %s28, %s19
    %p30 = scmp.ge.s32.totalorder %s29, 2
    %s31 = scalar_select %p30, 0, %s29
    %s32 = ssub.s32 %s19, %s31
    %s33 = ssub.s32 %s20, %s27
    %s34 = sor.u32 %s32, %s33
    %p35 = scmp.eq.s32.totalorder %s34, 0
    %s37 = sadd.s32 %s36, 1
    %s38 = scalar_select %p35, %s36, %s37
    %p41 = pneg %p35
    %p42 = scmp.eq.s32.totalorder %s12, 1
    %p43 = por %p41, %p42
    %p44 = scmp.ne.s32.totalorder %s36, %s39
    %p45 = scmp.eq.s32.totalorder %s12, 0
    %p46 = por %p44, %p45
    %p47 = scmp.ne.s32.totalorder %s36, %s39
    %p48 = scmp.eq.s32.totalorder %s17, 1
    %p49 = por %p47, %p48
    %p50 = scmp.ne.s32.totalorder %s39, %s40
    %p51 = scmp.eq.s32.totalorder %s17, 0
    %p52 = por %p50, %p51
    %p53 = scmp.ne.s32.totalorder %s39, %s40
    %p54 = scmp.eq.s32.totalorder %s18, 1
    %p55 = por %p53, %p54
    %p57 = scmp.ne.s32.totalorder %s40, %s56
    %p58 = scmp.eq.s32.totalorder %s18, 0
    %p59 = por %p57, %p58
    %s61 = sadd.s32 %s60, 1
    %p64 = scmp.eq.s32.totalorder %s12, 1
    %p65 = scmp.ne.s32.totalorder %s60, %s62
    %p66 = scmp.eq.s32.totalorder %s12, 0
    %p67 = por %p65, %p66
    %p68 = scmp.ne.s32.totalorder %s60, %s62
    %p69 = scmp.eq.s32.totalorder %s17, 1
    %p70 = por %p68, %p69
    %p71 = scmp.ne.s32.totalorder %s62, %s63
    %p72 = scmp.eq.s32.totalorder %s17, 0
    %p73 = por %p71, %p72
    %p74 = scmp.ne.s32.totalorder %s62, %s63
    %p75 = scmp.eq.s32.totalorder %s18, 1
    %p76 = por %p74, %p75
    %p78 = scmp.ne.s32.totalorder %s63, %s77
    %p79 = scmp.eq.s32.totalorder %s18, 0
    %p80 = por %p78, %p79
    %s82 = sadd.s32 %s81, 1
    %p85 = scmp.eq.s32.totalorder %s12, 1
    %p86 = scmp.ne.s32.totalorder %s81, %s83
    %p87 = scmp.eq.s32.totalorder %s12, 0
    %p88 = por %p86, %p87
    %p89 = scmp.ne.s32.totalorder %s81, %s83
    %p90 = scmp.eq.s32.totalorder %s17, 1
    %p91 = por %p89, %p90
    %p92 = scmp.ne.s32.totalorder %s83, %s84
    %p93 = scmp.eq.s32.totalorder %s17, 0
    %p94 = por %p92, %p93
    %p95 = scmp.ne.s32.totalorder %s83, %s84
    %p96 = scmp.eq.s32.totalorder %s18, 1
    %p97 = por %p95, %p96
    %p99 = scmp.ne.s32.totalorder %s84, %s98
    %p100 = scmp.eq.s32.totalorder %s18, 0
    %p101 = por %p99, %p100
    %s103 = sadd.s32 %s102, 1
    %p106 = scmp.eq.s32.totalorder %s12, 1
    %p107 = scmp.ne.s32.totalorder %s102, %s104
    %p108 = scmp.eq.s32.totalorder %s12, 0
    %p109 = por %p107, %p108
    %p110 = scmp.ne.s32.totalorder %s102, %s104
    %p111 = scmp.eq.s32.totalorder %s17, 1
    %p112 = por %p110, %p111
    %p113 = scmp.ne.s32.totalorder %s104, %s105
    %p114 = scmp.eq.s32.totalorder %s17, 0
    %p115 = por %p113, %p114
    %p116 = scmp.ne.s32.totalorder %s104, %s105
    %p117 = scmp.eq.s32.totalorder %s18, 1
    %p118 = por %p116, %p117
    %p120 = scmp.ne.s32.totalorder %s105, %s119
    %p121 = scmp.eq.s32.totalorder %s18, 0
    %p122 = por %p120, %p121
    %s124 = sadd.s32 %s123, 1
    %p127 = scmp.eq.s32.totalorder %s12, 1
    %p128 = scmp.ne.s32.totalorder %s123, %s125
    %p129 = scmp.eq.s32.totalorder %s12, 0
    %p130 = por %p128, %p129
    %p131 = scmp.ne.s32.totalorder %s123, %s125
    %p132 = scmp.eq.s32.totalorder %s17, 1
    %p133 = por %p131, %p132
    %p134 = scmp.ne.s32.totalorder %s125, %s126
    %p135 = scmp.eq.s32.totalorder %s17, 0
    %p136 = por %p134, %p135
    %p137 = scmp.ne.s32.totalorder %s125, %s126
    %p138 = scmp.eq.s32.totalorder %s18, 1
    %p139 = por %p137, %p138
    %p141 = scmp.ne.s32.totalorder %s126, %s140
    %p142 = scmp.eq.s32.totalorder %s18, 0
    %p143 = por %p141, %p142
    %s145 = sadd.s32 %s144, 1
    %p148 = scmp.eq.s32.totalorder %s12, 1
    %p149 = scmp.ne.s32.totalorder %s144, %s146
    %p150 = scmp.eq.s32.totalorder %s12, 0
    %p151 = por %p149, %p150
    %p152 = scmp.ne.s32.totalorder %s144, %s146
    %p153 = scmp.eq.s32.totalorder %s17, 1
    %p154 = por %p152, %p153
    %p155 = scmp.ne.s32.totalorder %s146, %s147
    %p156 = scmp.eq.s32.totalorder %s17, 0
    %p157 = por %p155, %p156
    %p158 = scmp.ne.s32.totalorder %s146, %s147
    %p159 = scmp.eq.s32.totalorder %s18, 1
    %p160 = por %p158, %p159
    %p162 = scmp.ne.s32.totalorder %s147, %s161
    %p163 = scmp.eq.s32.totalorder %s18, 0
    %p164 = por %p162, %p163
    %p165 = scmp.le.s32.totalorder 1, %s12
    %p166 = scmp.lt.s32.totalorder %s12, 3
    %p167 = pnand %p165, %p166
    %p168 = pneg %p167
    // Predicated region
    $region9: #{tpu_custom_call.1} parent=5 // pred_check
      _
    $region10: #{tpu_custom_call.1} parent=5 // pred_check_branch
      %170 = sbr.rel (%p167) target = $region12
    $region11: #{tpu_custom_call.1} parent=5 // pred_region
      %s171 = ssub.s32 %s12, 1
      // Predicated region
      $region13: #{tpu_custom_call.1} parent=11 // pred_check
        %p172 = pneg %p73
      $region14: #{tpu_custom_call.1} parent=11 // pred_check_branch
        %174 = sbr.rel (%p172) target = $region16
      $region15: #{tpu_custom_call.1} parent=11 // pred_region
        _
      $region16: #{tpu_custom_call.1} parent=11 // pred_fallthru
        _
      // Predicated region
      $region17: #{tpu_custom_call.1} parent=11 // pred_check
        %p175 = pneg %p94
      $region18: #{tpu_custom_call.1} parent=11 // pred_check_branch
        %177 = sbr.rel (%p175) target = $region20
      $region19: #{tpu_custom_call.1} parent=11 // pred_region
        _
      $region20: #{tpu_custom_call.1} parent=11 // pred_fallthru
        _
      // Predicated region
      $region21: #{tpu_custom_call.1} parent=11 // pred_check
        %p178 = pneg %p115
      $region22: #{tpu_custom_call.1} parent=11 // pred_check_branch
        %180 = sbr.rel (%p178) target = $region24
      $region23: #{tpu_custom_call.1} parent=11 // pred_region
        _
      $region24: #{tpu_custom_call.1} parent=11 // pred_fallthru
        _
    $region12: #{tpu_custom_call.1} parent=5 // pred_fallthru
      _
    %p181 = scmp.lt.s32.totalorder %s12, 2
    // Predicated region
    $region25: #{tpu_custom_call.1} parent=5 // pred_check
      %p182 = pneg %p181
    $region26: #{tpu_custom_call.1} parent=5 // pred_check_branch
      %184 = sbr.rel (%p182) target = $region28
    $region27: #{tpu_custom_call.1} parent=5 // pred_region
      // Predicated region
      $region29: #{tpu_custom_call.1} parent=27 // pred_check
        %p185 = pneg %p46
      $region30: #{tpu_custom_call.1} parent=27 // pred_check_branch
        %187 = sbr.rel (%p185) target = $region32
      $region31: #{tpu_custom_call.1} parent=27 // pred_region
        %s188 = smul.u32 2, %s20
        %p189 = scmp.lt.s32.totalorder %s19, 1
        %s190 = scalar_select %p189, %s19, 1
        %p191 = scmp.lt.s32.totalorder %s188, 1
        %s192 = scalar_select %p191, %s188, 1
        %s193 = smul.addr %s190, 2
        %s194 = sadd.s32 %s192, %s193
        %s195 = smul.addr %s194, 4
        %s196 = scalar_lea.vmem %s0, %s195
        %s197 = smul.u32 2, %s20
      $region32: #{tpu_custom_call.1} parent=27 // pred_fallthru
        _
    $region28: #{tpu_custom_call.1} parent=5 // pred_fallthru
      _
    %p198 = scmp.le.s32.totalorder 1, %s12
    %p199 = scmp.lt.s32.totalorder %s12, 3
    %p200 = pnand %p198, %p199
    %p201 = pneg %p200
    // Predicated region
    $region33: #{tpu_custom_call.1} parent=5 // pred_check
      _
    $region34: #{tpu_custom_call.1} parent=5 // pred_check_branch
      %203 = sbr.rel (%p200) target = $region36
    $region35: #{tpu_custom_call.1} parent=5 // pred_region
      %s204 = ssub.s32 %s12, 1
      %s205 = smul.u32 2, %s22
      %p206 = scmp.lt.s32.totalorder %s21, 1
      %s207 = scalar_select %p206, %s21, 1
      %p208 = scmp.lt.s32.totalorder %s205, 1
      %s209 = scalar_select %p208, %s205, 1
      %s210 = smul.addr %s207, 2
      %s211 = sadd.s32 %s209, %s210
      %s212 = smul.addr %s211, 4
      %s213 = scalar_lea.vmem %s0, %s212
      %p214 = pneg %p52
      %p215 = pneg %p49
      %p216 = pneg %p73
      %p217 = pneg %p70
      %p218 = pneg %p94
      %p219 = pneg %p91
      %p220 = pneg %p115
      %p221 = pneg %p112
      %p222 = pneg %p136
      %p223 = pneg %p133
      %p224 = pneg %p157
      %p225 = pneg %p154
      %s226 = smul.u32 2, %s22
      %p227 = scmp.lt.s32.totalorder %s21, 1
      %s228 = scalar_select %p227, %s21, 1
      %p229 = scmp.lt.s32.totalorder %s226, 1
      %s230 = scalar_select %p229, %s226, 1
      %s231 = smul.addr %s228, 2
      %s232 = sadd.s32 %s230, %s231
      %s233 = smul.addr %s232, 4
      %s234 = scalar_lea.vmem %s0, %s233
      %s235 = smul.u32 2, %s22
      %p236 = scmp.eq.s32.totalorder %s21, 0
      %p237 = scmp.eq.s32.totalorder %s22, 0
      %p238 = pnand %p236, %p237
      %p239 = pneg %p238
      %p240 = scmp.eq.s32.totalorder %s21, 1
      %p241 = pnand %p240, %p237
      %p242 = pneg %p241
      // Predicated region
      $region37: #{tpu_custom_call.1} parent=35 // pred_check
        _
      $region38: #{tpu_custom_call.1} parent=35 // pred_check_branch
        %244 = sbr.rel (%p238) target = $region40
      $region39: #{tpu_custom_call.1} parent=35 // pred_region
        %vm245 = vcmask 7168
        %246 = vst.msk [vmem:[#allocation2] sm:$0xff] %vm245, 0.0
        %247 = vst.msk [vmem:[#allocation3] sm:$0xff] %vm245, 0.0
      $region40: #{tpu_custom_call.1} parent=35 // pred_fallthru
        _
      %v248 = vld [vmem:[%s234] sm:$0xff]
      %v249 = vld [vmem:[%s1] sm:$0xff]
      %251 = vst [vmem:[#allocation1] ss:$2 sm:$0xff] %v248
      %v252 = vld.sshfl [vmem:[#allocation1] sm:$0xff pattern:$0x75316420]
      %v253 = vld.sshfl [vmem:[#allocation1 + $0x8] sm:$0xff pattern:$0x75316420]
      %vm254 = vcmask 31744
      %v256 = vsel %vm254, %v249, 0
      %vm258 = vcmask 1043456
      %v259 = vsel %vm258, %v252, 0
      %v261 = vsel %vm258, %v253, 0
      %263 = vmatpush.msra.mxu0 0.0
      %264 = vmatpush.msra.mxu0 0.0
      %265 = vmatpush.msra.mxu0 0.0
      %266 = vmatpush.msra.mxu0 0.0
      %267 = vmatpush.msra.mxu0 0.0
      %268 = vmatpush.msra.mxu0 0.0
      %269 = vmatpush.msra.mxu0 0.0
      %270 = vmatpush.msra.mxu0 0.0
      %271 = vmatpush.msra.mxu0 0.0
      %272 = vmatpush.msra.mxu0 0.0
      %273 = vmatpush.msra.mxu0 0.0
      %274 = vmatpush.msra.mxu0 0.0
      %275 = vmatpush.msra.mxu0 0.0
      %276 = vmatpush.msra.mxu0 0.0
      %277 = vmatpush.msra.mxu0 0.0
      %278 = vmatpush.msra.mxu0 %v259
      %279 = vmatmul.f32.gmra.mxu0 %v256
      %v280 = vpop.f32.mrf.mxu0
      %v281 = vadd.f32 0.0, %v280
      %282 = vdwg.mxu0
      %283 = vmatpush.msra.mxu0 0.0
      %284 = vmatpush.msra.mxu0 0.0
      %285 = vmatpush.msra.mxu0 0.0
      %286 = vmatpush.msra.mxu0 0.0
      %287 = vmatpush.msra.mxu0 0.0
      %288 = vmatpush.msra.mxu0 0.0
      %289 = vmatpush.msra.mxu0 0.0
      %290 = vmatpush.msra.mxu0 0.0
      %291 = vmatpush.msra.mxu0 0.0
      %292 = vmatpush.msra.mxu0 0.0
      %293 = vmatpush.msra.mxu0 0.0
      %294 = vmatpush.msra.mxu0 0.0
      %295 = vmatpush.msra.mxu0 0.0
      %296 = vmatpush.msra.mxu0 0.0
      %297 = vmatpush.msra.mxu0 0.0
      %298 = vmatpush.msra.mxu0 %v261
      %299 = vmatmul.f32.gmra.mxu0 %v256
      %v300 = vpop.f32.mrf.mxu0
      %v301 = vadd.f32 0.0, %v300
      %302 = vdwg.mxu0
      %v303 = vld [vmem:[#allocation2] sm:$0xff]
      %v304 = vadd.f32 %v281, %v301
      %305 = vadd.xlane.f32.xlu0 %v304
      %v306 = vpop.xlane.xlu0 %305
      %v307 = vadd.f32 %v303, %v306
      %vm308 = vcmask 7168
      %309 = vst.msk [vmem:[#allocation2] sm:$0xff] %vm308, %v307
      %v310 = vld [vmem:[#allocation3] sm:$0xff]
      %v311 = vmul.f32 %v281, %v281
      %v312 = vmul.f32 %v301, %v301
      %v313 = vadd.f32 %v311, %v312
      %314 = vadd.xlane.f32.xlu0 %v313
      %v315 = vpop.xlane.xlu0 %314
      %v316 = vadd.f32 %v310, %v315
      %317 = vst.msk [vmem:[#allocation3] sm:$0xff] %vm308, %v316
      // Predicated region
      $region41: #{tpu_custom_call.1} parent=35 // pred_check
        _
      $region42: #{tpu_custom_call.1} parent=35 // pred_check_branch
        %319 = sbr.rel (%p241) target = $region44
      $region43: #{tpu_custom_call.1} parent=35 // pred_region
        %v320 = vld [vmem:[#allocation2] sm:$0xff]
        %v321 = vmul.f32 %v320, 0.001953125
        %v322 = vld [vmem:[#allocation3] sm:$0xff]
        %v323 = vmul.f32 %v322, 0.001953125
        %v324 = vmul.f32 %v321, %v321
        %v325 = vsub.f32 %v323, %v324
        %v326 = vmax.f32 %v325, 0.0
        %v327 = vadd.f32 %v326, 1e-05
        %v328 = vrsqrt.pop %v327
        %v329 = vmul.f32 %v328, %v327
        %v330 = vmul.f32 %v329, %v328
        %v331 = vmul.f32 0.5, %v330
        %v332 = vsub.f32 1.5, %v331
        %v333 = vmul.f32 %v328, %v332
        %vm334 = vweird.f32 %v327
        %vm335 = vweird.f32 %v328
        %vm336 = vmor %vm334, %vm335
        %v337 = vsel %vm336, %v328, %v333
        %v338 = vld [vmem:[%s2] sm:$0xff]
        %v339 = vmul.f32 %v338, %v337
        %340 = vst.msk [vmem:[%s4] sm:$0xff] %vm308, %v339
        %v341 = vld [vmem:[%s3] sm:$0xff]
        %v342 = vmul.f32 %v321, %v339
        %v343 = vsub.f32 %v341, %v342
        %344 = vst.msk [vmem:[%s5] sm:$0xff] %vm308, %v343
      $region44: #{tpu_custom_call.1} parent=35 // pred_fallthru
        _
      // Predicated region
      $region45: #{tpu_custom_call.1} parent=35 // pred_check
        %p345 = pneg %p133
      $region46: #{tpu_custom_call.1} parent=35 // pred_check_branch
        %347 = sbr.rel (%p345) target = $region48
      $region47: #{tpu_custom_call.1} parent=35 // pred_region
        _
      $region48: #{tpu_custom_call.1} parent=35 // pred_fallthru
        _
      // Predicated region
      $region49: #{tpu_custom_call.1} parent=35 // pred_check
        %p348 = pneg %p154
      $region50: #{tpu_custom_call.1} parent=35 // pred_check_branch
        %350 = sbr.rel (%p348) target = $region52
      $region51: #{tpu_custom_call.1} parent=35 // pred_region
        _
      $region52: #{tpu_custom_call.1} parent=35 // pred_fallthru
        _
      // Predicated region
      $region53: #{tpu_custom_call.1} parent=35 // pred_check
        %p351 = pneg %p133
      $region54: #{tpu_custom_call.1} parent=35 // pred_check_branch
        %353 = sbr.rel (%p351) target = $region56
      $region55: #{tpu_custom_call.1} parent=35 // pred_region
        _
      $region56: #{tpu_custom_call.1} parent=35 // pred_fallthru
        _
      // Predicated region
      $region57: #{tpu_custom_call.1} parent=35 // pred_check
        %p354 = pneg %p154
      $region58: #{tpu_custom_call.1} parent=35 // pred_check_branch
        %356 = sbr.rel (%p354) target = $region60
      $region59: #{tpu_custom_call.1} parent=35 // pred_region
        _
      $region60: #{tpu_custom_call.1} parent=35 // pred_fallthru
        _
    $region36: #{tpu_custom_call.1} parent=5 // pred_fallthru
      _
    %p357 = scmp.le.s32.totalorder 2, %s12
    // Predicated region
    $region61: #{tpu_custom_call.1} parent=5 // pred_check
      %p358 = pneg %p357
    $region62: #{tpu_custom_call.1} parent=5 // pred_check_branch
      %360 = sbr.rel (%p358) target = $region64
    $region63: #{tpu_custom_call.1} parent=5 // pred_region
      %s361 = ssub.s32 %s12, 2
    $region64: #{tpu_custom_call.1} parent=5 // pred_fallthru
      _
  $region6: #{tpu_custom_call.1} parent=0 // loop_footer
    %s16 = sadd.s32 1, %s12
  $region7: #{tpu_custom_call.1} parent=0 // loop_footer_branch
    %11 = sbr.rel target = $region3
  $region8: #{tpu_custom_call.1} parent=0 // loop_exit
    _

</llo_original>
